<compile_context>
chip_gen: v7x
topology: tpu7x:2x2x1
jax: 0.10.0
libtpu: 0.0.40
codegen_flags: <defaults>
</compile_context>

<pallas_src>
import functools

import jax
import jax.numpy as jnp
from jax import lax
from jax.experimental import pallas as pl
from jax.experimental.pallas import tpu as pltpu

EPS = 1e-10
NEG_BIG = -1e30  # sentinel for padded lanes in the spatial softmax


def _pgd_cls_kernel(ps_ref, pt_ref, mfg_ref, mbg_ref, out_ref,
                    fmap_s_ref, fmap_t_ref, d2_ref, cnt_fg_ref, cnt_bg_ref, acc_ref,
                    *, temp_s, temp_c, loss_weight, alpha, beta, delta, hw_valid):
    phase = pl.program_id(0)          # 0: single pass over preds, 1: scratch-only finalize
    tile = pl.program_id(1)           # HW-tile index
    N, C, T = ps_ref.shape            # static
    n_tiles = fmap_s_ref.shape[0]
    has_tail = (n_tiles * T) != hw_valid   # static: true iff HW was zero-padded

    inv_ts = 1.0 / float(temp_s)
    inv_tc = 1.0 / float(temp_c)
    coef_fg = float(loss_weight) * float(alpha) / N
    coef_bg = float(loss_weight) * float(beta) / N
    coef_cm = float(delta) / (N * hw_valid)
    coef_sp = float(delta) / N

    # ---------------- init (first grid step) ----------------
    @pl.when((phase == 0) & (tile == 0))
    def _init():
        out_ref[...] = jnp.zeros_like(out_ref)
        acc_ref[...] = jnp.zeros_like(acc_ref)
        cnt_fg_ref[...] = jnp.zeros_like(cnt_fg_ref)
        cnt_bg_ref[...] = jnp.zeros_like(cnt_bg_ref)

    # ---------------- phase 0: the ONLY pass over ps/pt -----------------------
    @pl.when(phase == 0)
    def _phase0():
        ps = ps_ref[...].astype(jnp.float32)
        pt = pt_ref[...].astype(jnp.float32)
        mfg = mfg_ref[...].astype(jnp.float32)
        mbg = mbg_ref[...].astype(jnp.float32)

        # per-image nonzero counts (zero padding contributes exactly 0)
        cnt_fg_ref[...] += jnp.sum((mfg != 0.0).astype(jnp.float32),
                                   axis=1, keepdims=True)
        cnt_bg_ref[...] += jnp.sum((mbg != 0.0).astype(jnp.float32),
                                   axis=1, keepdims=True)

        # spatial feature maps (mean over C of |p|); padded lanes -> NEG_BIG so they
        # contribute nothing to the full-HW spatial softmax in phase 1.
        fmap_s = jnp.mean(jnp.abs(ps), axis=1)                 # (N, T)
        fmap_t = jnp.mean(jnp.abs(pt), axis=1)
        if has_tail:
            lane = lax.broadcasted_iota(jnp.int32, (N, T), 1)
            valid = (tile * T + lane) < hw_valid
            fmap_s = jnp.where(valid, fmap_s, NEG_BIG)
            fmap_t = jnp.where(valid, fmap_t, NEG_BIG)
        fmap_s_ref[tile] = fmap_s
        fmap_t_ref[tile] = fmap_t

        # channel attention (softmax over C) — per position, tiles freely over HW.
        # Divide is done on the C-reduced denominator, then applied as a multiply.
        def channel_attention(p):
            z = jnp.abs(p) * inv_tc
            z = z - jnp.max(z, axis=1, keepdims=True)
            e = jnp.exp(z)
            inv = float(C) / jnp.sum(e, axis=1, keepdims=True)  # (N, 1, T)
            return e * inv

        c_t = channel_attention(pt)                             # (N, C, T)
        c_s = channel_attention(ps)

        # fused feature-loss precursor: sum_C (ps - pt)^2 * C_t  (zero on padding)
        d = ps - pt
        d2_ref[tile] = jnp.sum(d * d * c_t, axis=1)             # (N, T)

        # channel part of the mask loss, accumulated as lane partials
        # (|C_s - C_t| == 0 exactly on zero-padded positions)
        cm_lane = jnp.sum(jnp.abs(c_s - c_t), axis=(0, 1),
                          keepdims=True).reshape(1, T)          # (1, T)
        acc_ref[...] += coef_cm * cm_lane

    # ---------------- phase 1: scratch-only finalize (no ps/pt reads) ----------
    @pl.when(phase == 1)
    def _phase1():
        # Full-HW spatial softmax, streamed tile-by-tile over the fmap scratch
        # (done once, at the first tile of phase 1).
        @pl.when(tile == 0)
        def _finalize_spatial():
            def stats_body(i, carry):
                ms, ls, mt, lt = carry
                fs = fmap_s_ref[i] * inv_ts                     # (N, T)
                ft = fmap_t_ref[i] * inv_ts
                ms_n = jnp.maximum(ms, jnp.max(fs, axis=1, keepdims=True))
                mt_n = jnp.maximum(mt, jnp.max(ft, axis=1, keepdims=True))
                ls = ls * jnp.exp(ms - ms_n) + jnp.sum(jnp.exp(fs - ms_n),
                                                       axis=1, keepdims=True)
                lt = lt * jnp.exp(mt - mt_n) + jnp.sum(jnp.exp(ft - mt_n),
                                                       axis=1, keepdims=True)
                return ms_n, ls, mt_n, lt

            neg = jnp.full((N, 1), NEG_BIG, jnp.float32)
            zero = jnp.zeros((N, 1), jnp.float32)
            ms, ls, mt, lt = lax.fori_loop(0, n_tiles, stats_body,
                                           (neg, zero, neg, zero))
            scale_s = float(hw_valid) / ls                      # (N, 1) small divides
            scale_t = float(hw_valid) / lt

            def apply_body(i, carry):
                s_s = jnp.exp(fmap_s_ref[i] * inv_ts - ms) * scale_s   # (N, T)
                s_t = jnp.exp(fmap_t_ref[i] * inv_ts - mt) * scale_t
                fmap_t_ref[i] = s_t       # teacher spatial attention, reused below
                acc_ref[...] += coef_sp * jnp.sum(jnp.abs(s_s - s_t),
                                                  axis=0, keepdims=True)
                return carry
            lax.fori_loop(0, n_tiles, apply_body, 0)

        # per-tile feature loss using only masks (small) + scratch
        mfg = mfg_ref[...].astype(jnp.float32)
        mbg = mbg_ref[...].astype(jnp.float32)
        inv_cfg = 1.0 / jnp.maximum(cnt_fg_ref[...], EPS)       # (N, 1)
        inv_cbg = 1.0 / jnp.maximum(cnt_bg_ref[...], EPS)
        w_fg = jnp.sum(mfg * inv_cfg, axis=0, keepdims=True)     # (1, T)
        w_bg = jnp.sum(mbg * inv_cbg, axis=0, keepdims=True)

        s_att_t = fmap_t_ref[tile]                               # (N, T) teacher S_t
        d2 = jnp.sum(s_att_t * d2_ref[tile], axis=0, keepdims=True)   # (1, T)
        acc_ref[...] += (coef_fg * w_fg + coef_bg * w_bg) * d2

    # ---------------- epilogue: single cross-lane reduce + scalar store --------
    @pl.when((phase == 1) & (tile == n_tiles - 1))
    def _epilogue():
        out_ref[...] = jnp.sum(acc_ref[...], keepdims=True)


def _round_up(x, m):
    return ((x + m - 1) // m) * m


def _choose_tile(HW, requested):
    """Lane-aligned tile, never larger than `requested` (except rounding HW<=req up
    to the next lane multiple so a single tile covers everything)."""
    req = max(128, (int(requested) // 128) * 128)
    if HW <= req:
        return _round_up(HW, 128)
    return req


def _default_vmem_limit(N, C, T, n_tiles, pred_itemsize, mask_itemsize):
    pred_blocks = 2 * 2 * N * C * T * pred_itemsize      # 2 inputs x double buffer
    mask_blocks = 2 * 2 * N * T * mask_itemsize
    scratch = (3 * n_tiles * N * T + 2 * N + T) * 4
    temporaries = 8 * N * C * T * 4                       # f32 working set in phase 0
    est = pred_blocks + mask_blocks + scratch + temporaries
    return int(min(128 * 1024 * 1024, max(32 * 1024 * 1024, 2 * est)))


def pgd_cls_loss(preds_S, preds_T, mask_fg, mask_bg, *,
                 temp_s, temp_c, loss_weight, alpha, beta, delta,
                 hw_tile=512, vmem_limit_bytes=None):
    """preds_{S,T}: (N, C, H, W) any float dtype; mask_{fg,bg}: (N, 1, H, W).

    Returns the scalar distillation loss (float32). Inputs are passed to the kernel
    in their native dtype; all math is done in float32 in-kernel (matching the
    @force_fp32 decorator of the reference module).
    """
    N, C, H, W = preds_S.shape
    HW = H * W

    # glue only: flatten spatial dims onto the lane axis (no dtype cast here)
    ps = preds_S.reshape(N, C, HW)
    pt = preds_T.reshape(N, C, HW)
    mfg = mask_fg.reshape(N, HW)
    mbg = mask_bg.reshape(N, HW)

    T = _choose_tile(HW, hw_tile)
    HW_pad = _round_up(HW, T)
    n_tiles = HW_pad // T
    if HW_pad != HW:
        # Zero padding keeps counts, C_att difference, d2 and mask weights exactly
        # unchanged; only the spatial softmax needs in-kernel tail masking (NEG_BIG).
        # TODO(synk): an in-kernel partial-last-block variant would avoid this extra
        #             HBM pad copy of preds for non-128-multiple HW.
        pad = HW_pad - HW
        ps = jnp.pad(ps, ((0, 0), (0, 0), (0, pad)))
        pt = jnp.pad(pt, ((0, 0), (0, 0), (0, pad)))
        mfg = jnp.pad(mfg, ((0, 0), (0, pad)))
        mbg = jnp.pad(mbg, ((0, 0), (0, pad)))

    if vmem_limit_bytes is None:
        vmem_limit_bytes = _default_vmem_limit(
            N, C, T, n_tiles,
            jnp.dtype(preds_S.dtype).itemsize, jnp.dtype(mask_fg.dtype).itemsize)

    kernel = functools.partial(
        _pgd_cls_kernel,
        temp_s=float(temp_s), temp_c=float(temp_c),
        loss_weight=float(loss_weight), alpha=float(alpha),
        beta=float(beta), delta=float(delta), hw_valid=int(HW))

    # ps/pt block index is frozen at the last tile during phase 1 so Pallas elides
    # their DMA for the whole finalize pass (they are not read there).
    pred_map = lambda p, t: (0, 0, (1 - p) * t + p * (n_tiles - 1))
    mask_map = lambda p, t: (0, t)

    grid_spec = pltpu.PrefetchScalarGridSpec(
        num_scalar_prefetch=0,
        grid=(2, n_tiles),  # (phase, hw_tile); phase 0 = preds pass, phase 1 = finalize
        in_specs=[
            pl.BlockSpec((N, C, T), pred_map),
            pl.BlockSpec((N, C, T), pred_map),
            pl.BlockSpec((N, T), mask_map),
            pl.BlockSpec((N, T), mask_map),
        ],
        out_specs=pl.BlockSpec((1, 1), lambda p, t: (0, 0)),
        scratch_shapes=[
            pltpu.VMEM((n_tiles, N, T), jnp.float32),   # fea_map_S (student)
            pltpu.VMEM((n_tiles, N, T), jnp.float32),   # fea_map_T -> S_att_T
            pltpu.VMEM((n_tiles, N, T), jnp.float32),   # sum_C (ps-pt)^2 * C_t
            pltpu.VMEM((N, 1), jnp.float32),            # fg nonzero counts
            pltpu.VMEM((N, 1), jnp.float32),            # bg nonzero counts
            pltpu.VMEM((1, T), jnp.float32),            # lane-dense loss accumulator
        ],
    )

    out = pl.pallas_call(
        kernel,
        out_shape=jax.ShapeDtypeStruct((1, 1), jnp.float32),
        grid_spec=grid_spec,
        compiler_params=pltpu.CompilerParams(
            dimension_semantics=("arbitrary", "arbitrary"),
            vmem_limit_bytes=int(vmem_limit_bytes)),
    )(ps, pt, mfg, mbg)
    return out[0, 0]


def reference_loss(preds_S, preds_T, mask_fg, mask_bg, *,
                   temp_s, temp_c, loss_weight, alpha, beta, delta):
    """Plain-JAX transcription of the PyTorch forward (incl. the 5-D broadcast)."""
    eps = 1e-10
    f32 = jnp.float32
    preds_S = preds_S.astype(f32)
    preds_T = preds_T.astype(f32)
    mask_bg = mask_bg / jnp.maximum(
        jnp.sum((mask_bg != 0).astype(f32), axis=(2, 3), keepdims=True), eps)
    mask_fg = mask_fg / jnp.maximum(
        jnp.sum((mask_fg != 0).astype(f32), axis=(2, 3), keepdims=True), eps)

    def get_attention(preds):
        N, C, H, W = preds.shape
        value = jnp.abs(preds)
        fea_map = jnp.mean(value, axis=1, keepdims=True)
        S_att = (H * W * jax.nn.softmax((fea_map / temp_s).reshape(N, -1),
                                        axis=1)).reshape(N, H, W)
        C_att = C * jax.nn.softmax(value / temp_c, axis=1)
        return S_att, C_att

    S_t, C_t = get_attention(preds_T)
    S_s, C_s = get_attention(preds_S)

    Mfg = mask_fg[:, None]          # (N,1,1,H,W)
    Mbg = mask_bg[:, None]
    St = S_t[:, None]               # (N,1,H,W)
    fea_t = preds_T * jnp.sqrt(St) * jnp.sqrt(C_t)
    fea_s = preds_S * jnp.sqrt(St) * jnp.sqrt(C_t)
    fg_fea_t = fea_t * jnp.sqrt(Mfg)   # (N,N,C,H,W)
    bg_fea_t = fea_t * jnp.sqrt(Mbg)
    fg_fea_s = fea_s * jnp.sqrt(Mfg)
    bg_fea_s = fea_s * jnp.sqrt(Mbg)

    N = preds_S.shape[0]
    H, W = C_s.shape[-2], C_s.shape[-1]
    fg_loss = jnp.sum((fg_fea_s - fg_fea_t) ** 2) / N
    bg_loss = jnp.sum((bg_fea_s - bg_fea_t) ** 2) / N
    mask_loss = (jnp.sum(jnp.abs(C_s - C_t)) / (N * H * W)
                 + jnp.sum(jnp.abs(S_s - S_t)) / N)
    return (loss_weight * alpha * fg_loss
            + loss_weight * beta * bg_loss
            + delta * mask_loss)


if __name__ == "__main__":
    key = jax.random.PRNGKey(0)
    hparams = dict(temp_s=0.5, temp_c=0.5, loss_weight=1.0,
                   alpha=0.001, beta=0.0005, delta=5e-7)

    # --- test 1: HW divisible by the tile (multi-tile grid path, no padding) ----
    k1, k2, k3, k4, key = jax.random.split(key, 5)
    N, C, H, W = 2, 4, 16, 16
    preds_S = jax.random.normal(k1, (N, C, H, W), jnp.float32).astype(jnp.bfloat16)
    preds_T = jax.random.normal(k2, (N, C, H, W), jnp.float32).astype(jnp.bfloat16)
    mask_fg = jnp.maximum(jax.random.normal(k3, (N, 1, H, W), jnp.float32), 0.0)
    mask_bg = jnp.maximum(jax.random.normal(k4, (N, 1, H, W), jnp.float32), 0.0)

    out = jax.block_until_ready(
        pgd_cls_loss(preds_S, preds_T, mask_fg, mask_bg, hw_tile=128, **hparams))
    ref = reference_loss(preds_S, preds_T, mask_fg, mask_bg, **hparams)
    assert jnp.isfinite(out), out
    assert jnp.allclose(out, ref, rtol=1e-3, atol=1e-6), (float(out), float(ref))

    # --- test 2: HW NOT a multiple of 128 (exercises pad + tail masking) --------
    k1, k2, k3, k4, key = jax.random.split(key, 5)
    N, C, H, W = 2, 4, 10, 13   # HW = 130 -> padded to 256, 2 tiles of 128
    preds_S = jax.random.normal(k1, (N, C, H, W), jnp.float32).astype(jnp.bfloat16)
    preds_T = jax.random.normal(k2, (N, C, H, W), jnp.float32).astype(jnp.bfloat16)
    mask_fg = jnp.maximum(jax.random.normal(k3, (N, 1, H, W), jnp.float32), 0.0)
    mask_bg = jnp.maximum(jax.random.normal(k4, (N, 1, H, W), jnp.float32), 0.0)

    out2 = jax.block_until_ready(
        pgd_cls_loss(preds_S, preds_T, mask_fg, mask_bg, hw_tile=128, **hparams))
    ref2 = reference_loss(preds_S, preds_T, mask_fg, mask_bg, **hparams)
    assert jnp.isfinite(out2), out2
    assert jnp.allclose(out2, ref2, rtol=1e-3, atol=1e-6), (float(out2), float(ref2))

    print("KERNEL_OK")
</pallas_src>

<mosaic_0001>
module attributes {stable_mosaic.version = 11 : i64} {
  func.func @_pgd_cls_kernel(%arg0: i32, %arg1: i32, %arg2: memref<2x4x128xbf16, #tpu.memory_space<vmem>>, %arg3: memref<2x4x128xbf16, #tpu.memory_space<vmem>>, %arg4: memref<2x128xf32, #tpu.memory_space<vmem>>, %arg5: memref<2x128xf32, #tpu.memory_space<vmem>>, %arg6: memref<1x1xf32, #tpu.memory_space<vmem>>, %arg7: memref<2x2x128xf32, #tpu.memory_space<vmem>>, %arg8: memref<2x2x128xf32, #tpu.memory_space<vmem>>, %arg9: memref<2x2x128xf32, #tpu.memory_space<vmem>>, %arg10: memref<2x1xf32, #tpu.memory_space<vmem>>, %arg11: memref<2x1xf32, #tpu.memory_space<vmem>>, %arg12: memref<1x128xf32, #tpu.memory_space<vmem>>) attributes {dimension_semantics = [#tpu.dimension_semantics<arbitrary>, #tpu.dimension_semantics<arbitrary>], iteration_bounds = array<i64: 2, 2>, scalar_prefetch = 0 : i64, scratch_operands = 6 : i64, tpu.core_type = #tpu.core_type<tc>, window_params = [{transform_indices = @transform_0, window_bounds = array<i64: 2, 4, 128>}, {transform_indices = @transform_1, window_bounds = array<i64: 2, 4, 128>}, {transform_indices = @transform_2, window_bounds = array<i64: 2, 128>}, {transform_indices = @transform_3, window_bounds = array<i64: 2, 128>}, {pipeline_mode = #tpu.pipeline_mode<synchronous>, transform_indices = @transform_4, window_bounds = array<i64: 1, 1>}]} {
    %c0_i32 = arith.constant 0 : i32
    %0 = arith.cmpi eq, %arg0, %c0_i32 : i32
    %c0_i32_0 = arith.constant 0 : i32
    %1 = arith.cmpi eq, %arg1, %c0_i32_0 : i32
    %2 = arith.andi %0, %1 : i1
    %3 = arith.extui %2 : i1 to i32
    %c0_i32_1 = arith.constant 0 : i32
    %4 = arith.cmpi ne, %3, %c0_i32_1 : i32
    scf.if %4 {
      %cst = arith.constant 0.000000e+00 : f32
      %16 = vector.broadcast %cst : f32 to vector<1x1xf32>
      %c0 = arith.constant 0 : index
      %c0_8 = arith.constant 0 : index
      %17 = vector.load %arg6[%c0, %c0_8] : memref<1x1xf32, #tpu.memory_space<vmem>>, vector<1x1xf32>
      tpu.vector_store %arg6[%c0, %c0_8], %16 {strides = array<i32>} : memref<1x1xf32, #tpu.memory_space<vmem>>, vector<1x1xf32>,
      %cst_9 = arith.constant 0.000000e+00 : f32
      %18 = vector.broadcast %cst_9 : f32 to vector<1x128xf32>
      %c0_10 = arith.constant 0 : index
      %c0_11 = arith.constant 0 : index
      %19 = vector.load %arg12[%c0_10, %c0_11] : memref<1x128xf32, #tpu.memory_space<vmem>>, vector<1x128xf32>
      tpu.vector_store %arg12[%c0_10, %c0_11], %18 {strides = array<i32>} : memref<1x128xf32, #tpu.memory_space<vmem>>, vector<1x128xf32>,
      %cst_12 = arith.constant 0.000000e+00 : f32
      %20 = vector.broadcast %cst_12 : f32 to vector<2x1xf32>
      %c0_13 = arith.constant 0 : index
      %c0_14 = arith.constant 0 : index
      %21 = vector.load %arg10[%c0_13, %c0_14] : memref<2x1xf32, #tpu.memory_space<vmem>>, vector<2x1xf32>
      tpu.vector_store %arg10[%c0_13, %c0_14], %20 {strides = array<i32>} : memref<2x1xf32, #tpu.memory_space<vmem>>, vector<2x1xf32>,
      %cst_15 = arith.constant 0.000000e+00 : f32
      %22 = vector.broadcast %cst_15 : f32 to vector<2x1xf32>
      %c0_16 = arith.constant 0 : index
      %c0_17 = arith.constant 0 : index
      %23 = vector.load %arg11[%c0_16, %c0_17] : memref<2x1xf32, #tpu.memory_space<vmem>>, vector<2x1xf32>
      tpu.vector_store %arg11[%c0_16, %c0_17], %22 {strides = array<i32>} : memref<2x1xf32, #tpu.memory_space<vmem>>, vector<2x1xf32>,
    } else {
    }
    %c0_i32_2 = arith.constant 0 : i32
    %5 = arith.cmpi eq, %arg0, %c0_i32_2 : i32
    %6 = arith.extui %5 : i1 to i32
    %c0_i32_3 = arith.constant 0 : i32
    %7 = arith.cmpi ne, %6, %c0_i32_3 : i32
    scf.if %7 {
      %c0 = arith.constant 0 : index
      %c0_8 = arith.constant 0 : index
      %c0_9 = arith.constant 0 : index
      %16 = vector.load %arg2[%c0, %c0_8, %c0_9] : memref<2x4x128xbf16, #tpu.memory_space<vmem>>, vector<2x4x128xbf16>
      %17 = arith.extf %16 : vector<2x4x128xbf16> to vector<2x4x128xf32>
      %c0_10 = arith.constant 0 : index
      %c0_11 = arith.constant 0 : index
      %c0_12 = arith.constant 0 : index
      %18 = vector.load %arg3[%c0_10, %c0_11, %c0_12] : memref<2x4x128xbf16, #tpu.memory_space<vmem>>, vector<2x4x128xbf16>
      %19 = arith.extf %18 : vector<2x4x128xbf16> to vector<2x4x128xf32>
      %c0_13 = arith.constant 0 : index
      %c0_14 = arith.constant 0 : index
      %20 = vector.load %arg4[%c0_13, %c0_14] : memref<2x128xf32, #tpu.memory_space<vmem>>, vector<2x128xf32>
      %c0_15 = arith.constant 0 : index
      %c0_16 = arith.constant 0 : index
      %21 = vector.load %arg5[%c0_15, %c0_16] : memref<2x128xf32, #tpu.memory_space<vmem>>, vector<2x128xf32>
      %c0_17 = arith.constant 0 : index
      %c0_18 = arith.constant 0 : index
      %22 = vector.load %arg10[%c0_17, %c0_18] : memref<2x1xf32, #tpu.memory_space<vmem>>, vector<2x1xf32>
      %cst = arith.constant 0.000000e+00 : f32
      %23 = vector.broadcast %cst : f32 to vector<2x128xf32>
      %24 = arith.cmpf one, %20, %23 : vector<2x128xf32>
      %25 = arith.extui %24 : vector<2x128xi1> to vector<2x128xi32>
      %26 = arith.sitofp %25 : vector<2x128xi32> to vector<2x128xf32>
      %cst_19 = arith.constant dense<0.000000e+00> : vector<2xf32>
      %27 = vector.multi_reduction <add>, %26, %cst_19 [1] : vector<2x128xf32> to vector<2xf32>
      %28 = vector.shape_cast %27 : vector<2xf32> to vector<2x1xf32>
      %29 = arith.addf %22, %28 : vector<2x1xf32>
      %c0_20 = arith.constant 0 : index
      %c0_21 = arith.constant 0 : index
      %30 = vector.load %arg10[%c0_20, %c0_21] : memref<2x1xf32, #tpu.memory_space<vmem>>, vector<2x1xf32>
      tpu.vector_store %arg10[%c0_20, %c0_21], %29 {strides = array<i32>} : memref<2x1xf32, #tpu.memory_space<vmem>>, vector<2x1xf32>,
      %c0_22 = arith.constant 0 : index
      %c0_23 = arith.constant 0 : index
      %31 = vector.load %arg11[%c0_22, %c0_23] : memref<2x1xf32, #tpu.memory_space<vmem>>, vector<2x1xf32>
      %cst_24 = arith.constant 0.000000e+00 : f32
      %32 = vector.broadcast %cst_24 : f32 to vector<2x128xf32>
      %33 = arith.cmpf one, %21, %32 : vector<2x128xf32>
      %34 = arith.extui %33 : vector<2x128xi1> to vector<2x128xi32>
      %35 = arith.sitofp %34 : vector<2x128xi32> to vector<2x128xf32>
      %cst_25 = arith.constant dense<0.000000e+00> : vector<2xf32>
      %36 = vector.multi_reduction <add>, %35, %cst_25 [1] : vector<2x128xf32> to vector<2xf32>
      %37 = vector.shape_cast %36 : vector<2xf32> to vector<2x1xf32>
      %38 = arith.addf %31, %37 : vector<2x1xf32>
      %c0_26 = arith.constant 0 : index
      %c0_27 = arith.constant 0 : index
      %39 = vector.load %arg11[%c0_26, %c0_27] : memref<2x1xf32, #tpu.memory_space<vmem>>, vector<2x1xf32>
      tpu.vector_store %arg11[%c0_26, %c0_27], %38 {strides = array<i32>} : memref<2x1xf32, #tpu.memory_space<vmem>>, vector<2x1xf32>,
      %40 = math.absf %17 : vector<2x4x128xf32>
      %cst_28 = arith.constant dense<0.000000e+00> : vector<2x128xf32>
      %41 = vector.multi_reduction <add>, %40, %cst_28 [1] : vector<2x4x128xf32> to vector<2x128xf32>
      %cst_29 = arith.constant 4.000000e+00 : f32
      %42 = vector.broadcast %cst_29 : f32 to vector<2x128xf32>
      %43 = arith.divf %41, %42 : vector<2x128xf32>
      %44 = math.absf %19 : vector<2x4x128xf32>
      %cst_30 = arith.constant dense<0.000000e+00> : vector<2x128xf32>
      %45 = vector.multi_reduction <add>, %44, %cst_30 [1] : vector<2x4x128xf32> to vector<2x128xf32>
      %cst_31 = arith.constant 4.000000e+00 : f32
      %46 = vector.broadcast %cst_31 : f32 to vector<2x128xf32>
      %47 = arith.divf %45, %46 : vector<2x128xf32>
      %48 = arith.index_cast %arg1 : i32 to index
      %c0_32 = arith.constant 0 : index
      %c0_33 = arith.constant 0 : index
      %49 = vector.load %arg7[%48, %c0_32, %c0_33] : memref<2x2x128xf32, #tpu.memory_space<vmem>>, vector<1x2x128xf32>
      %50 = vector.shape_cast %49 : vector<1x2x128xf32> to vector<2x128xf32>
      %51 = vector.shape_cast %43 : vector<2x128xf32> to vector<1x2x128xf32>
      tpu.vector_store %arg7[%48, %c0_32, %c0_33], %51 {strides = array<i32>} : memref<2x2x128xf32, #tpu.memory_space<vmem>>, vector<1x2x128xf32>,
      %52 = arith.index_cast %arg1 : i32 to index
      %c0_34 = arith.constant 0 : index
      %c0_35 = arith.constant 0 : index
      %53 = vector.load %arg8[%52, %c0_34, %c0_35] : memref<2x2x128xf32, #tpu.memory_space<vmem>>, vector<1x2x128xf32>
      %54 = vector.shape_cast %53 : vector<1x2x128xf32> to vector<2x128xf32>
      %55 = vector.shape_cast %47 : vector<2x128xf32> to vector<1x2x128xf32>
      tpu.vector_store %arg8[%52, %c0_34, %c0_35], %55 {strides = array<i32>} : memref<2x2x128xf32, #tpu.memory_space<vmem>>, vector<1x2x128xf32>,
      %56 = math.absf %19 : vector<2x4x128xf32>
      %cst_36 = arith.constant 2.000000e+00 : f32
      %57 = vector.broadcast %cst_36 : f32 to vector<2x4x128xf32>
      %58 = arith.mulf %56, %57 : vector<2x4x128xf32>
      %cst_37 = arith.constant dense<0xFF800000> : vector<2x128xf32>
      %59 = vector.multi_reduction <maximumf>, %58, %cst_37 [1] : vector<2x4x128xf32> to vector<2x128xf32>
      %60 = vector.shape_cast %59 : vector<2x128xf32> to vector<2x1x128xf32>
      %61 = vector.broadcast %60 : vector<2x1x128xf32> to vector<2x4x128xf32>
      %62 = arith.subf %58, %61 : vector<2x4x128xf32>
      %63 = math.exp %62 : vector<2x4x128xf32>
      %cst_38 = arith.constant dense<0.000000e+00> : vector<2x128xf32>
      %64 = vector.multi_reduction <add>, %63, %cst_38 [1] : vector<2x4x128xf32> to vector<2x128xf32>
      %65 = vector.shape_cast %64 : vector<2x128xf32> to vector<2x1x128xf32>
      %cst_39 = arith.constant 4.000000e+00 : f32
      %66 = vector.broadcast %cst_39 : f32 to vector<2x1x128xf32>
      %67 = arith.divf %66, %65 : vector<2x1x128xf32>
      %68 = vector.broadcast %67 : vector<2x1x128xf32> to vector<2x4x128xf32>
      %69 = arith.mulf %63, %68 : vector<2x4x128xf32>
      %70 = math.absf %17 : vector<2x4x128xf32>
      %cst_40 = arith.constant 2.000000e+00 : f32
      %71 = vector.broadcast %cst_40 : f32 to vector<2x4x128xf32>
      %72 = arith.mulf %70, %71 : vector<2x4x128xf32>
      %cst_41 = arith.constant dense<0xFF800000> : vector<2x128xf32>
      %73 = vector.multi_reduction <maximumf>, %72, %cst_41 [1] : vector<2x4x128xf32> to vector<2x128xf32>
      %74 = vector.shape_cast %73 : vector<2x128xf32> to vector<2x1x128xf32>
      %75 = vector.broadcast %74 : vector<2x1x128xf32> to vector<2x4x128xf32>
      %76 = arith.subf %72, %75 : vector<2x4x128xf32>
      %77 = math.exp %76 : vector<2x4x128xf32>
      %cst_42 = arith.constant dense<0.000000e+00> : vector<2x128xf32>
      %78 = vector.multi_reduction <add>, %77, %cst_42 [1] : vector<2x4x128xf32> to vector<2x128xf32>
      %79 = vector.shape_cast %78 : vector<2x128xf32> to vector<2x1x128xf32>
      %cst_43 = arith.constant 4.000000e+00 : f32
      %80 = vector.broadcast %cst_43 : f32 to vector<2x1x128xf32>
      %81 = arith.divf %80, %79 : vector<2x1x128xf32>
      %82 = vector.broadcast %81 : vector<2x1x128xf32> to vector<2x4x128xf32>
      %83 = arith.mulf %77, %82 : vector<2x4x128xf32>
      %84 = arith.subf %17, %19 : vector<2x4x128xf32>
      %85 = arith.mulf %84, %84 : vector<2x4x128xf32>
      %86 = arith.mulf %85, %69 : vector<2x4x128xf32>
      %cst_44 = arith.constant dense<0.000000e+00> : vector<2x128xf32>
      %87 = vector.multi_reduction <add>, %86, %cst_44 [1] : vector<2x4x128xf32> to vector<2x128xf32>
      %88 = arith.index_cast %arg1 : i32 to index
      %c0_45 = arith.constant 0 : index
      %c0_46 = arith.constant 0 : index
      %89 = vector.load %arg9[%88, %c0_45, %c0_46] : memref<2x2x128xf32, #tpu.memory_space<vmem>>, vector<1x2x128xf32>
      %90 = vector.shape_cast %89 : vector<1x2x128xf32> to vector<2x128xf32>
      %91 = vector.shape_cast %87 : vector<2x128xf32> to vector<1x2x128xf32>
      tpu.vector_store %arg9[%88, %c0_45, %c0_46], %91 {strides = array<i32>} : memref<2x2x128xf32, #tpu.memory_space<vmem>>, vector<1x2x128xf32>,
      %92 = arith.subf %83, %69 : vector<2x4x128xf32>
      %93 = math.absf %92 : vector<2x4x128xf32>
      %cst_47 = arith.constant dense<0.000000e+00> : vector<128xf32>
      %94 = vector.multi_reduction <add>, %93, %cst_47 [0, 1] : vector<2x4x128xf32> to vector<128xf32>
      %95 = vector.shape_cast %94 : vector<128xf32> to vector<1x1x128xf32>
      %96 = vector.shape_cast %95 : vector<1x1x128xf32> to vector<1x128xf32>
      %c0_48 = arith.constant 0 : index
      %c0_49 = arith.constant 0 : index
      %97 = vector.load %arg12[%c0_48, %c0_49] : memref<1x128xf32, #tpu.memory_space<vmem>>, vector<1x128xf32>
      %cst_50 = arith.constant 9.76562497E-10 : f32
      %98 = vector.broadcast %cst_50 : f32 to vector<1x128xf32>
      %99 = arith.mulf %98, %96 : vector<1x128xf32>
      %100 = arith.addf %97, %99 : vector<1x128xf32>
      %c0_51 = arith.constant 0 : index
      %c0_52 = arith.constant 0 : index
      %101 = vector.load %arg12[%c0_51, %c0_52] : memref<1x128xf32, #tpu.memory_space<vmem>>, vector<1x128xf32>
      tpu.vector_store %arg12[%c0_51, %c0_52], %100 {strides = array<i32>} : memref<1x128xf32, #tpu.memory_space<vmem>>, vector<1x128xf32>,
    } else {
    }
    %c1_i32 = arith.constant 1 : i32
    %8 = arith.cmpi eq, %arg0, %c1_i32 : i32
    %9 = arith.extui %8 : i1 to i32
    %c0_i32_4 = arith.constant 0 : i32
    %10 = arith.cmpi ne, %9, %c0_i32_4 : i32
    scf.if %10 {
      %c0_i32_8 = arith.constant 0 : i32
      %16 = arith.cmpi eq, %arg1, %c0_i32_8 : i32
      %17 = arith.extui %16 : i1 to i32
      %c0_i32_9 = arith.constant 0 : i32
      %18 = arith.cmpi ne, %17, %c0_i32_9 : i32
      scf.if %18 {
        %cst_33 = arith.constant -1.000000e+30 : f32
        %57 = vector.broadcast %cst_33 : f32 to vector<2x1xf32>
        %cst_34 = arith.constant 0.000000e+00 : f32
        %58 = vector.broadcast %cst_34 : f32 to vector<2x1xf32>
        %c0_i32_35 = arith.constant 0 : i32
        %c2_i32 = arith.constant 2 : i32
        %59 = arith.addi %c0_i32_35, %c2_i32 : i32
        %c1_i32_36 = arith.constant 1 : i32
        %60:4 = scf.for %arg13 = %c0_i32_35 to %59 step %c1_i32_36 iter_args(%arg14 = %57, %arg15 = %58, %arg16 = %57, %arg17 = %58) -> (vector<2x1xf32>, vector<2x1xf32>, vector<2x1xf32>, vector<2x1xf32>)  : i32 {
          %66 = arith.index_cast %arg13 : i32 to index
          %c0_44 = arith.constant 0 : index
          %c0_45 = arith.constant 0 : index
          %67 = vector.load %arg7[%66, %c0_44, %c0_45] : memref<2x2x128xf32, #tpu.memory_space<vmem>>, vector<1x2x128xf32>
          %68 = vector.shape_cast %67 : vector<1x2x128xf32> to vector<2x128xf32>
          %cst_46 = arith.constant 2.000000e+00 : f32
          %69 = vector.broadcast %cst_46 : f32 to vector<2x128xf32>
          %70 = arith.mulf %68, %69 : vector<2x128xf32>
          %71 = arith.index_cast %arg13 : i32 to index
          %c0_47 = arith.constant 0 : index
          %c0_48 = arith.constant 0 : index
          %72 = vector.load %arg8[%71, %c0_47, %c0_48] : memref<2x2x128xf32, #tpu.memory_space<vmem>>, vector<1x2x128xf32>
          %73 = vector.shape_cast %72 : vector<1x2x128xf32> to vector<2x128xf32>
          %cst_49 = arith.constant 2.000000e+00 : f32
          %74 = vector.broadcast %cst_49 : f32 to vector<2x128xf32>
          %75 = arith.mulf %73, %74 : vector<2x128xf32>
          %cst_50 = arith.constant dense<0xFF800000> : vector<2xf32>
          %76 = vector.multi_reduction <maximumf>, %70, %cst_50 [1] : vector<2x128xf32> to vector<2xf32>
          %77 = vector.shape_cast %76 : vector<2xf32> to vector<2x1xf32>
          %78 = arith.maximumf %arg14, %77 : vector<2x1xf32>
          %cst_51 = arith.constant dense<0xFF800000> : vector<2xf32>
          %79 = vector.multi_reduction <maximumf>, %75, %cst_51 [1] : vector<2x128xf32> to vector<2xf32>
          %80 = vector.shape_cast %79 : vector<2xf32> to vector<2x1xf32>
          %81 = arith.maximumf %arg16, %80 : vector<2x1xf32>
          %82 = arith.subf %arg14, %78 : vector<2x1xf32>
          %83 = math.exp %82 : vector<2x1xf32>
          %84 = arith.mulf %arg15, %83 : vector<2x1xf32>
          %85 = vector.broadcast %78 : vector<2x1xf32> to vector<2x128xf32>
          %86 = arith.subf %70, %85 : vector<2x128xf32>
          %87 = math.exp %86 : vector<2x128xf32>
          %cst_52 = arith.constant dense<0.000000e+00> : vector<2xf32>
          %88 = vector.multi_reduction <add>, %87, %cst_52 [1] : vector<2x128xf32> to vector<2xf32>
          %89 = vector.shape_cast %88 : vector<2xf32> to vector<2x1xf32>
          %90 = arith.addf %84, %89 : vector<2x1xf32>
          %91 = arith.subf %arg16, %81 : vector<2x1xf32>
          %92 = math.exp %91 : vector<2x1xf32>
          %93 = arith.mulf %arg17, %92 : vector<2x1xf32>
          %94 = vector.broadcast %81 : vector<2x1xf32> to vector<2x128xf32>
          %95 = arith.subf %75, %94 : vector<2x128xf32>
          %96 = math.exp %95 : vector<2x128xf32>
          %cst_53 = arith.constant dense<0.000000e+00> : vector<2xf32>
          %97 = vector.multi_reduction <add>, %96, %cst_53 [1] : vector<2x128xf32> to vector<2xf32>
          %98 = vector.shape_cast %97 : vector<2xf32> to vector<2x1xf32>
          %99 = arith.addf %93, %98 : vector<2x1xf32>
          scf.yield %78, %90, %81, %99 : vector<2x1xf32>, vector<2x1xf32>, vector<2x1xf32>, vector<2x1xf32>
        }
        %c2_i32_37 = arith.constant 2 : i32
        %cst_38 = arith.constant 2.560000e+02 : f32
        %61 = vector.broadcast %cst_38 : f32 to vector<2x1xf32>
        %62 = arith.divf %61, %60#1 : vector<2x1xf32>
        %cst_39 = arith.constant 2.560000e+02 : f32
        %63 = vector.broadcast %cst_39 : f32 to vector<2x1xf32>
        %64 = arith.divf %63, %60#3 : vector<2x1xf32>
        %c0_i32_40 = arith.constant 0 : i32
        %c2_i32_41 = arith.constant 2 : i32
        %65 = arith.addi %c0_i32_40, %c2_i32_41 : i32
        %c1_i32_42 = arith.constant 1 : i32
        scf.for %arg13 = %c0_i32_40 to %65 step %c1_i32_42  : i32 {
          %66 = arith.index_cast %arg13 : i32 to index
          %c0_44 = arith.constant 0 : index
          %c0_45 = arith.constant 0 : index
          %67 = vector.load %arg7[%66, %c0_44, %c0_45] : memref<2x2x128xf32, #tpu.memory_space<vmem>>, vector<1x2x128xf32>
          %68 = vector.shape_cast %67 : vector<1x2x128xf32> to vector<2x128xf32>
          %cst_46 = arith.constant 2.000000e+00 : f32
          %69 = vector.broadcast %cst_46 : f32 to vector<2x128xf32>
          %70 = arith.mulf %68, %69 : vector<2x128xf32>
          %71 = vector.broadcast %60#0 : vector<2x1xf32> to vector<2x128xf32>
          %72 = arith.subf %70, %71 : vector<2x128xf32>
          %73 = math.exp %72 : vector<2x128xf32>
          %74 = vector.broadcast %62 : vector<2x1xf32> to vector<2x128xf32>
          %75 = arith.mulf %73, %74 : vector<2x128xf32>
          %76 = arith.index_cast %arg13 : i32 to index
          %c0_47 = arith.constant 0 : index
          %c0_48 = arith.constant 0 : index
          %77 = vector.load %arg8[%76, %c0_47, %c0_48] : memref<2x2x128xf32, #tpu.memory_space<vmem>>, vector<1x2x128xf32>
          %78 = vector.shape_cast %77 : vector<1x2x128xf32> to vector<2x128xf32>
          %cst_49 = arith.constant 2.000000e+00 : f32
          %79 = vector.broadcast %cst_49 : f32 to vector<2x128xf32>
          %80 = arith.mulf %78, %79 : vector<2x128xf32>
          %81 = vector.broadcast %60#2 : vector<2x1xf32> to vector<2x128xf32>
          %82 = arith.subf %80, %81 : vector<2x128xf32>
          %83 = math.exp %82 : vector<2x128xf32>
          %84 = vector.broadcast %64 : vector<2x1xf32> to vector<2x128xf32>
          %85 = arith.mulf %83, %84 : vector<2x128xf32>
          %86 = arith.index_cast %arg13 : i32 to index
          %c0_50 = arith.constant 0 : index
          %c0_51 = arith.constant 0 : index
          %87 = vector.load %arg8[%86, %c0_50, %c0_51] : memref<2x2x128xf32, #tpu.memory_space<vmem>>, vector<1x2x128xf32>
          %88 = vector.shape_cast %87 : vector<1x2x128xf32> to vector<2x128xf32>
          %89 = vector.shape_cast %85 : vector<2x128xf32> to vector<1x2x128xf32>
          tpu.vector_store %arg8[%86, %c0_50, %c0_51], %89 {strides = array<i32>} : memref<2x2x128xf32, #tpu.memory_space<vmem>>, vector<1x2x128xf32>,
          %c0_52 = arith.constant 0 : index
          %c0_53 = arith.constant 0 : index
          %90 = vector.load %arg12[%c0_52, %c0_53] : memref<1x128xf32, #tpu.memory_space<vmem>>, vector<1x128xf32>
          %91 = arith.subf %75, %85 : vector<2x128xf32>
          %92 = math.absf %91 : vector<2x128xf32>
          %cst_54 = arith.constant dense<0.000000e+00> : vector<128xf32>
          %93 = vector.multi_reduction <add>, %92, %cst_54 [0] : vector<2x128xf32> to vector<128xf32>
          %94 = vector.shape_cast %93 : vector<128xf32> to vector<1x128xf32>
          %cst_55 = arith.constant 2.500000e-07 : f32
          %95 = vector.broadcast %cst_55 : f32 to vector<1x128xf32>
          %96 = arith.mulf %95, %94 : vector<1x128xf32>
          %97 = arith.addf %90, %96 : vector<1x128xf32>
          %c0_56 = arith.constant 0 : index
          %c0_57 = arith.constant 0 : index
          %98 = vector.load %arg12[%c0_56, %c0_57] : memref<1x128xf32, #tpu.memory_space<vmem>>, vector<1x128xf32>
          tpu.vector_store %arg12[%c0_56, %c0_57], %97 {strides = array<i32>} : memref<1x128xf32, #tpu.memory_space<vmem>>, vector<1x128xf32>,
        }
        %c2_i32_43 = arith.constant 2 : i32
      } else {
      }
      %c0 = arith.constant 0 : index
      %c0_10 = arith.constant 0 : index
      %19 = vector.load %arg4[%c0, %c0_10] : memref<2x128xf32, #tpu.memory_space<vmem>>, vector<2x128xf32>
      %c0_11 = arith.constant 0 : index
      %c0_12 = arith.constant 0 : index
      %20 = vector.load %arg5[%c0_11, %c0_12] : memref<2x128xf32, #tpu.memory_space<vmem>>, vector<2x128xf32>
      %c0_13 = arith.constant 0 : index
      %c0_14 = arith.constant 0 : index
      %21 = vector.load %arg10[%c0_13, %c0_14] : memref<2x1xf32, #tpu.memory_space<vmem>>, vector<2x1xf32>
      %cst = arith.constant 1.000000e-10 : f32
      %22 = vector.broadcast %cst : f32 to vector<2x1xf32>
      %23 = arith.maximumf %21, %22 : vector<2x1xf32>
      %cst_15 = arith.constant 1.000000e+00 : f32
      %24 = vector.broadcast %cst_15 : f32 to vector<2x1xf32>
      %25 = arith.divf %24, %23 : vector<2x1xf32>
      %c0_16 = arith.constant 0 : index
      %c0_17 = arith.constant 0 : index
      %26 = vector.load %arg11[%c0_16, %c0_17] : memref<2x1xf32, #tpu.memory_space<vmem>>, vector<2x1xf32>
      %cst_18 = arith.constant 1.000000e-10 : f32
      %27 = vector.broadcast %cst_18 : f32 to vector<2x1xf32>
      %28 = arith.maximumf %26, %27 : vector<2x1xf32>
      %cst_19 = arith.constant 1.000000e+00 : f32
      %29 = vector.broadcast %cst_19 : f32 to vector<2x1xf32>
      %30 = arith.divf %29, %28 : vector<2x1xf32>
      %31 = vector.broadcast %25 : vector<2x1xf32> to vector<2x128xf32>
      %32 = arith.mulf %19, %31 : vector<2x128xf32>
      %cst_20 = arith.constant dense<0.000000e+00> : vector<128xf32>
      %33 = vector.multi_reduction <add>, %32, %cst_20 [0] : vector<2x128xf32> to vector<128xf32>
      %34 = vector.shape_cast %33 : vector<128xf32> to vector<1x128xf32>
      %35 = vector.broadcast %30 : vector<2x1xf32> to vector<2x128xf32>
      %36 = arith.mulf %20, %35 : vector<2x128xf32>
      %cst_21 = arith.constant dense<0.000000e+00> : vector<128xf32>
      %37 = vector.multi_reduction <add>, %36, %cst_21 [0] : vector<2x128xf32> to vector<128xf32>
      %38 = vector.shape_cast %37 : vector<128xf32> to vector<1x128xf32>
      %39 = arith.index_cast %arg1 : i32 to index
      %c0_22 = arith.constant 0 : index
      %c0_23 = arith.constant 0 : index
      %40 = vector.load %arg8[%39, %c0_22, %c0_23] : memref<2x2x128xf32, #tpu.memory_space<vmem>>, vector<1x2x128xf32>
      %41 = vector.shape_cast %40 : vector<1x2x128xf32> to vector<2x128xf32>
      %42 = arith.index_cast %arg1 : i32 to index
      %c0_24 = arith.constant 0 : index
      %c0_25 = arith.constant 0 : index
      %43 = vector.load %arg9[%42, %c0_24, %c0_25] : memref<2x2x128xf32, #tpu.memory_space<vmem>>, vector<1x2x128xf32>
      %44 = vector.shape_cast %43 : vector<1x2x128xf32> to vector<2x128xf32>
      %45 = arith.mulf %41, %44 : vector<2x128xf32>
      %cst_26 = arith.constant dense<0.000000e+00> : vector<128xf32>
      %46 = vector.multi_reduction <add>, %45, %cst_26 [0] : vector<2x128xf32> to vector<128xf32>
      %47 = vector.shape_cast %46 : vector<128xf32> to vector<1x128xf32>
      %c0_27 = arith.constant 0 : index
      %c0_28 = arith.constant 0 : index
      %48 = vector.load %arg12[%c0_27, %c0_28] : memref<1x128xf32, #tpu.memory_space<vmem>>, vector<1x128xf32>
      %cst_29 = arith.constant 5.000000e-04 : f32
      %49 = vector.broadcast %cst_29 : f32 to vector<1x128xf32>
      %50 = arith.mulf %49, %34 : vector<1x128xf32>
      %cst_30 = arith.constant 2.500000e-04 : f32
      %51 = vector.broadcast %cst_30 : f32 to vector<1x128xf32>
      %52 = arith.mulf %51, %38 : vector<1x128xf32>
      %53 = arith.addf %50, %52 : vector<1x128xf32>
      %54 = arith.mulf %53, %47 : vector<1x128xf32>
      %55 = arith.addf %48, %54 : vector<1x128xf32>
      %c0_31 = arith.constant 0 : index
      %c0_32 = arith.constant 0 : index
      %56 = vector.load %arg12[%c0_31, %c0_32] : memref<1x128xf32, #tpu.memory_space<vmem>>, vector<1x128xf32>
      tpu.vector_store %arg12[%c0_31, %c0_32], %55 {strides = array<i32>} : memref<1x128xf32, #tpu.memory_space<vmem>>, vector<1x128xf32>,
    } else {
    }
    %c1_i32_5 = arith.constant 1 : i32
    %11 = arith.cmpi eq, %arg0, %c1_i32_5 : i32
    %c1_i32_6 = arith.constant 1 : i32
    %12 = arith.cmpi eq, %arg1, %c1_i32_6 : i32
    %13 = arith.andi %11, %12 : i1
    %14 = arith.extui %13 : i1 to i32
    %c0_i32_7 = arith.constant 0 : i32
    %15 = arith.cmpi ne, %14, %c0_i32_7 : i32
    scf.if %15 {
      %c0 = arith.constant 0 : index
      %c0_8 = arith.constant 0 : index
      %16 = vector.load %arg12[%c0, %c0_8] : memref<1x128xf32, #tpu.memory_space<vmem>>, vector<1x128xf32>
      %17 = vector.shape_cast %16 : vector<1x128xf32> to vector<1x1x128xf32>
      %cst = arith.constant dense<0.000000e+00> : vector<1xf32>
      %18 = vector.multi_reduction <add>, %17, %cst [1, 2] : vector<1x1x128xf32> to vector<1xf32>
      %19 = vector.shape_cast %18 : vector<1xf32> to vector<1x1x1xf32>
      %20 = vector.extract %19[0, 0, 0] : f32 from vector<1x1x1xf32>
      %21 = vector.broadcast %20 : f32 to vector<1x1xf32>
      %c0_9 = arith.constant 0 : index
      %c0_10 = arith.constant 0 : index
      %22 = vector.load %arg6[%c0_9, %c0_10] : memref<1x1xf32, #tpu.memory_space<vmem>>, vector<1x1xf32>
      tpu.vector_store %arg6[%c0_9, %c0_10], %21 {strides = array<i32>} : memref<1x1xf32, #tpu.memory_space<vmem>>, vector<1x1xf32>,
    } else {
    }
    return
  }
  func.func @transform_0(%arg0: i32, %arg1: i32) -> (i32, i32, i32) {
    %c1_i32 = arith.constant 1 : i32
    %0 = arith.subi %c1_i32, %arg0 : i32
    %1 = arith.muli %0, %arg1 : i32
    %c1_i32_0 = arith.constant 1 : i32
    %2 = arith.muli %arg0, %c1_i32_0 : i32
    %3 = arith.addi %1, %2 : i32
    %c0_i32 = arith.constant 0 : i32
    %c0_i32_1 = arith.constant 0 : i32
    %c0_i32_2 = arith.constant 0 : i32
    return %c0_i32, %c0_i32_1, %3 : i32, i32, i32
  }
  func.func @transform_1(%arg0: i32, %arg1: i32) -> (i32, i32, i32) {
    %c1_i32 = arith.constant 1 : i32
    %0 = arith.subi %c1_i32, %arg0 : i32
    %1 = arith.muli %0, %arg1 : i32
    %c1_i32_0 = arith.constant 1 : i32
    %2 = arith.muli %arg0, %c1_i32_0 : i32
    %3 = arith.addi %1, %2 : i32
    %c0_i32 = arith.constant 0 : i32
    %c0_i32_1 = arith.constant 0 : i32
    %c0_i32_2 = arith.constant 0 : i32
    return %c0_i32, %c0_i32_1, %3 : i32, i32, i32
  }
  func.func @transform_2(%arg0: i32, %arg1: i32) -> (i32, i32) {
    %c0_i32 = arith.constant 0 : i32
    %c0_i32_0 = arith.constant 0 : i32
    return %c0_i32, %arg1 : i32, i32
  }
  func.func @transform_3(%arg0: i32, %arg1: i32) -> (i32, i32) {
    %c0_i32 = arith.constant 0 : i32
    %c0_i32_0 = arith.constant 0 : i32
    return %c0_i32, %arg1 : i32, i32
  }
  func.func @transform_4(%arg0: i32, %arg1: i32) -> (i32, i32) {
    %c0_i32 = arith.constant 0 : i32
    %c0_i32_0 = arith.constant 0 : i32
    %c0_i32_1 = arith.constant 0 : i32
    return %c0_i32, %c0_i32_0 : i32, i32
  }
}

</mosaic_0001>

<llo_original>
// kernel: tpu_custom_call.1
$region0: #{tpu_custom_call.1}
  #allocation0 [shape = 'u32[]', space=smem, size = 0x4, offset = 0x4, fixed_abs, tag = 'smem constant byte address 0x4 - core index']
  #allocation1 [shape = 'u32[144,128]{1,0:T(1,128)}', space=vmem, size = 0x12000, scoped, tag = 'internal scratch']
  #allocation2 [shape = 'f32[2,2,128]{2,1,0:T(2,128)}', space=vmem, size = 0x800, scoped, tag = 'scratch operand']
  #allocation3 [shape = 'f32[2,2,128]{2,1,0:T(2,128)}', space=vmem, size = 0x800, scoped, tag = 'scratch operand']
  #allocation4 [shape = 'f32[2,2,128]{2,1,0:T(2,128)}', space=vmem, size = 0x800, scoped, tag = 'scratch operand']
  #allocation5 [shape = 'f32[2,1]{1,0:T(2,128)}', space=vmem, size = 0x400, scoped, tag = 'scratch operand']
  #allocation6 [shape = 'f32[2,1]{1,0:T(2,128)}', space=vmem, size = 0x400, scoped, tag = 'scratch operand']
  #allocation7 [shape = 'f32[1,128]{1,0:T(1,128)}', space=vmem, size = 0x200, scoped, tag = 'scratch operand']
  %s0 = inlined_call_operand.hbm [shape: bf16[2,4,256], index: 0, kind: input, shape index: {}]
  %s1 = inlined_call_operand.hbm [shape: bf16[2,4,256], index: 1, kind: input, shape index: {}]
  %s2 = inlined_call_operand.vmem [shape: f32[2,256], index: 2, kind: input, shape index: {}]
  %s3 = inlined_call_operand.vmem [shape: f32[2,256], index: 3, kind: input, shape index: {}]
  %s4 = inlined_call_operand.hbm [shape: f32[1,1], index: 4, kind: output, shape index: {}]
  %s5 = sld [smem:[#allocation0]]
  $region91: #{tpu_custom_call.1} parent=0
    _
  %s7 = ssub.s32 1, %s5
  %s8 = scalar_select 0, %s7, %s5
  $region1: #{tpu_custom_call.1} parent=0
    #allocation8 [shape = 'u8[4096]{0}', space=vmem, size = 0x1000, scoped, tag = 'input window, operand 0']
    #allocation9 [shape = 's32[2]{0}', space=sflag, size = 0x8, scoped, tag = 'scoped memory for tpu_custom_call.1']
    #allocation10 [shape = 's32[2]{0}', space=sflag, size = 0x8, scoped, tag = 'scoped memory for tpu_custom_call.1']
    #allocation11 [shape = 'u8[4096]{0}', space=vmem, size = 0x1000, scoped, tag = 'input window, operand 1']
    #allocation12 [shape = 's32[2]{0}', space=sflag, size = 0x8, scoped, tag = 'scoped memory for tpu_custom_call.1']
    #allocation13 [shape = 'u8[512]{0}', space=vmem, size = 0x400, scoped, tag = 'output window, operand 0, single buffered']
    %9 = vsyncpa [#allocation9], 0
    %s10 = scalar_lea.sflag [#allocation9], 1
    %11 = vsyncpa %s10, 0
    %12 = vsyncpa [#allocation12], 0
    %s13 = scalar_lea.sflag [#allocation12], 1
    %14 = vsyncpa %s13, 0
    %15 = vsyncpa [#allocation10], 0
    loop: start=0, step=1, limit=6
    $region2: #{tpu_custom_call.1} parent=1 // loop_pre_header
      _
    $region3: #{tpu_custom_call.1} parent=1 // loop_header
      %s17 = sphi 0, %s21
      %p18 = scmp.ge.s32.totalorder %s17, 6
      %s24 = sphi 0, %s36
      %s25 = sphi 0, %s32
      %s26 = sphi 0, %s24
      %s27 = sphi 0, %s25
      %s28 = sphi 0, %s26
      %s29 = sphi 0, %s27
      %s45 = sphi 0, %s47
      %s48 = sphi 0, %s45
      %s49 = sphi 0, %s48
      %s65 = sphi 0, %s49
      %s77 = sphi 0, %s79
      %s80 = sphi 0, %s77
      %s81 = sphi 0, %s80
      %s97 = sphi 0, %s81
      %s103 = sphi 0, %s105
      %s106 = sphi 0, %s103
      %s107 = sphi 0, %s106
      %s123 = sphi 0, %s107
      %s129 = sphi 0, %s131
      %s132 = sphi 0, %s129
      %s133 = sphi 0, %s132
      %s149 = sphi 0, %s133
      %s153 = sphi 0, %s153
      %s155 = sphi 0, %s153
      %s156 = sphi 0, %s155
      %s170 = sphi 0, %s156
    $region4: #{tpu_custom_call.1} parent=1 // loop_header_branch
      %20 = sbr.rel (%p18) target = $region8
    $region5: #{tpu_custom_call.1} parent=1 // loop_body
      %s22 = ssub.s32 %s17, 1
      %s23 = ssub.s32 %s17, 2
      %s30 = sadd.s32 1, %s25
      %p31 = scmp.ge.s32.totalorder %s30, 2
      %s32 = scalar_select %p31, 0, %s30
      %s33 = sadd.s32 1, %s24
      %s34 = scalar_select %p31, %s33, %s24
      %p35 = scmp.ge.s32.totalorder %s34, 2
      %s36 = scalar_select %p35, 0, %s34
      %s37 = ssub.s32 1, %s24
      %s38 = smul.u32 %s37, %s25
      %s39 = sadd.s32 %s38, %s24
      %s40 = ssub.s32 1, %s36
      %s41 = smul.u32 %s40, %s32
      %s42 = sadd.s32 %s41, %s36
      %s43 = ssub.s32 %s39, %s42
      %p44 = scmp.eq.s32.totalorder %s43, 0
      %s46 = sadd.s32 %s45, 1
      %s47 = scalar_select %p44, %s45, %s46
      %p50 = pneg %p44
      %p51 = scmp.eq.s32.totalorder %s17, 3
      %p52 = por %p50, %p51
      %p53 = scmp.ne.s32.totalorder %s45, %s48
      %p54 = scmp.eq.s32.totalorder %s17, 0
      %p55 = por %p53, %p54
      %p56 = scmp.ne.s32.totalorder %s45, %s48
      %p57 = scmp.eq.s32.totalorder %s22, 3
      %p58 = por %p56, %p57
      %p59 = scmp.ne.s32.totalorder %s48, %s49
      %p60 = scmp.eq.s32.totalorder %s22, 0
      %p61 = por %p59, %p60
      %p62 = scmp.ne.s32.totalorder %s48, %s49
      %p63 = scmp.eq.s32.totalorder %s23, 3
      %p64 = por %p62, %p63
      %p66 = scmp.ne.s32.totalorder %s49, %s65
      %p67 = scmp.eq.s32.totalorder %s23, 0
      %p68 = por %p66, %p67
      %s69 = ssub.s32 1, %s24
      %s70 = smul.u32 %s69, %s25
      %s71 = sadd.s32 %s70, %s24
      %s72 = ssub.s32 1, %s36
      %s73 = smul.u32 %s72, %s32
      %s74 = sadd.s32 %s73, %s36
      %s75 = ssub.s32 %s71, %s74
      %p76 = scmp.eq.s32.totalorder %s75, 0
      %s78 = sadd.s32 %s77, 1
      %s79 = scalar_select %p76, %s77, %s78
      %p82 = pneg %p76
      %p83 = scmp.eq.s32.totalorder %s17, 3
      %p84 = por %p82, %p83
      %p85 = scmp.ne.s32.totalorder %s77, %s80
      %p86 = scmp.eq.s32.totalorder %s17, 0
      %p87 = por %p85, %p86
      %p88 = scmp.ne.s32.totalorder %s77, %s80
      %p89 = scmp.eq.s32.totalorder %s22, 3
      %p90 = por %p88, %p89
      %p91 = scmp.ne.s32.totalorder %s80, %s81
      %p92 = scmp.eq.s32.totalorder %s22, 0
      %p93 = por %p91, %p92
      %p94 = scmp.ne.s32.totalorder %s80, %s81
      %p95 = scmp.eq.s32.totalorder %s23, 3
      %p96 = por %p94, %p95
      %p98 = scmp.ne.s32.totalorder %s81, %s97
      %p99 = scmp.eq.s32.totalorder %s23, 0
      %p100 = por %p98, %p99
      %s101 = ssub.s32 %s25, %s32
      %p102 = scmp.eq.s32.totalorder %s101, 0
      %s104 = sadd.s32 %s103, 1
      %s105 = scalar_select %p102, %s103, %s104
      %p108 = pneg %p102
      %p109 = scmp.eq.s32.totalorder %s17, 3
      %p110 = por %p108, %p109
      %p111 = scmp.ne.s32.totalorder %s103, %s106
      %p112 = scmp.eq.s32.totalorder %s17, 0
      %p113 = por %p111, %p112
      %p114 = scmp.ne.s32.totalorder %s103, %s106
      %p115 = scmp.eq.s32.totalorder %s22, 3
      %p116 = por %p114, %p115
      %p117 = scmp.ne.s32.totalorder %s106, %s107
      %p118 = scmp.eq.s32.totalorder %s22, 0
      %p119 = por %p117, %p118
      %p120 = scmp.ne.s32.totalorder %s106, %s107
      %p121 = scmp.eq.s32.totalorder %s23, 3
      %p122 = por %p120, %p121
      %p124 = scmp.ne.s32.totalorder %s107, %s123
      %p125 = scmp.eq.s32.totalorder %s23, 0
      %p126 = por %p124, %p125
      %s127 = ssub.s32 %s25, %s32
      %p128 = scmp.eq.s32.totalorder %s127, 0
      %s130 = sadd.s32 %s129, 1
      %s131 = scalar_select %p128, %s129, %s130
      %p134 = pneg %p128
      %p135 = scmp.eq.s32.totalorder %s17, 3
      %p136 = por %p134, %p135
      %p137 = scmp.ne.s32.totalorder %s129, %s132
      %p138 = scmp.eq.s32.totalorder %s17, 0
      %p139 = por %p137, %p138
      %p140 = scmp.ne.s32.totalorder %s129, %s132
      %p141 = scmp.eq.s32.totalorder %s22, 3
      %p142 = por %p140, %p141
      %p143 = scmp.ne.s32.totalorder %s132, %s133
      %p144 = scmp.eq.s32.totalorder %s22, 0
      %p145 = por %p143, %p144
      %p146 = scmp.ne.s32.totalorder %s132, %s133
      %p147 = scmp.eq.s32.totalorder %s23, 3
      %p148 = por %p146, %p147
      %p150 = scmp.ne.s32.totalorder %s133, %s149
      %p151 = scmp.eq.s32.totalorder %s23, 0
      %p152 = por %p150, %p151
      %s154 = sadd.s32 %s153, 1
      %p157 = scmp.eq.s32.totalorder %s17, 3
      %p158 = scmp.ne.s32.totalorder %s153, %s155
      %p159 = scmp.eq.s32.totalorder %s17, 0
      %p160 = por %p158, %p159
      %p161 = scmp.ne.s32.totalorder %s153, %s155
      %p162 = scmp.eq.s32.totalorder %s22, 3
      %p163 = por %p161, %p162
      %p164 = scmp.ne.s32.totalorder %s155, %s156
      %p165 = scmp.eq.s32.totalorder %s22, 0
      %p166 = por %p164, %p165
      %p167 = scmp.ne.s32.totalorder %s155, %s156
      %p168 = scmp.eq.s32.totalorder %s23, 3
      %p169 = por %p167, %p168
      %p171 = scmp.ne.s32.totalorder %s156, %s170
      %p172 = scmp.eq.s32.totalorder %s23, 0
      %p173 = por %p171, %p172
      %p174 = scmp.le.s32.totalorder 1, %s17
      %p175 = scmp.lt.s32.totalorder %s17, 5
      %p176 = pnand %p174, %p175
      %p177 = pneg %p176
      // Predicated region
      $region9: #{tpu_custom_call.1} parent=5 // pred_check
        _
      $region10: #{tpu_custom_call.1} parent=5 // pred_check_branch
        %179 = sbr.rel (%p176) target = $region12
      $region11: #{tpu_custom_call.1} parent=5 // pred_region
        %s180 = ssub.s32 %s17, 1
      $region12: #{tpu_custom_call.1} parent=5 // pred_fallthru
        _
      %p181 = scmp.lt.s32.totalorder %s17, 4
      // Predicated region
      $region13: #{tpu_custom_call.1} parent=5 // pred_check
        %p182 = pneg %p181
      $region14: #{tpu_custom_call.1} parent=5 // pred_check_branch
        %184 = sbr.rel (%p182) target = $region16
      $region15: #{tpu_custom_call.1} parent=5 // pred_region
        // Predicated region
        $region17: #{tpu_custom_call.1} parent=15 // pred_check
          %p185 = pneg %p55
        $region18: #{tpu_custom_call.1} parent=15 // pred_check_branch
          %187 = sbr.rel (%p185) target = $region20
        $region19: #{tpu_custom_call.1} parent=15 // pred_region
          %s188 = sand.u32 %s45, 1
          %s189 = scalar_lea.sflag [#allocation9], %s188
          %s190 = sand.u32 %s45, 1
          %s191 = smul.addr %s190, 4
          %s192 = scalar_lea.vmem [#allocation8], %s191
          %s193 = ssub.s32 1, %s24
          %s194 = smul.u32 %s193, %s25
          %s195 = sadd.s32 %s194, %s24
          %s197 = ssub.s32 64, 64
          %198 = vsyncadd %s189, %s197
          %s199 = smul.addr %s195, 32
          %s200 = scalar_lea.hbm %s0, %s199
          %s201 = sshll.u32 %s192, 4
          %s202 = int_to_ptr.vmem [resolvable:$true] %s201
          %207 = dma.hbm_to_vmem [thread:$0]  %s200, 64, %s202, %s189, 64, 32, 2
        $region20: #{tpu_custom_call.1} parent=15 // pred_fallthru
          _
        // Predicated region
        $region21: #{tpu_custom_call.1} parent=15 // pred_check
          %p208 = pneg %p87
        $region22: #{tpu_custom_call.1} parent=15 // pred_check_branch
          %210 = sbr.rel (%p208) target = $region24
        $region23: #{tpu_custom_call.1} parent=15 // pred_region
          %s211 = sand.u32 %s77, 1
          %s212 = scalar_lea.sflag [#allocation12], %s211
          %s213 = sand.u32 %s77, 1
          %s214 = smul.addr %s213, 4
          %s215 = scalar_lea.vmem [#allocation11], %s214
          %s216 = ssub.s32 1, %s24
          %s217 = smul.u32 %s216, %s25
          %s218 = sadd.s32 %s217, %s24
          %s220 = ssub.s32 64, 64
          %221 = vsyncadd %s212, %s220
          %s222 = smul.addr %s218, 32
          %s223 = scalar_lea.hbm %s1, %s222
          %s224 = sshll.u32 %s215, 4
          %s225 = int_to_ptr.vmem [resolvable:$true] %s224
          %230 = dma.hbm_to_vmem [thread:$0]  %s223, 64, %s225, %s212, 64, 32, 2
        $region24: #{tpu_custom_call.1} parent=15 // pred_fallthru
          _
        // Predicated region
        $region25: #{tpu_custom_call.1} parent=15 // pred_check
          %p231 = pneg %p113
        $region26: #{tpu_custom_call.1} parent=15 // pred_check_branch
          %233 = sbr.rel (%p231) target = $region28
        $region27: #{tpu_custom_call.1} parent=15 // pred_region
          %p234 = scmp.lt.s32.totalorder %s25, 1
          %s235 = scalar_select %p234, %s25, 1
          %s236 = smul.addr %s235, 2
          %s237 = scalar_lea.vmem %s2, %s236
        $region28: #{tpu_custom_call.1} parent=15 // pred_fallthru
          _
        // Predicated region
        $region29: #{tpu_custom_call.1} parent=15 // pred_check
          %p238 = pneg %p139
        $region30: #{tpu_custom_call.1} parent=15 // pred_check_branch
          %240 = sbr.rel (%p238) target = $region32
        $region31: #{tpu_custom_call.1} parent=15 // pred_region
          %p241 = scmp.lt.s32.totalorder %s25, 1
          %s242 = scalar_select %p241, %s25, 1
          %s243 = smul.addr %s242, 2
          %s244 = scalar_lea.vmem %s3, %s243
        $region32: #{tpu_custom_call.1} parent=15 // pred_fallthru
          _
      $region16: #{tpu_custom_call.1} parent=5 // pred_fallthru
        _
      %p245 = scmp.le.s32.totalorder 1, %s17
      %p246 = scmp.lt.s32.totalorder %s17, 5
      %p247 = pnand %p245, %p246
      %p248 = pneg %p247
      // Predicated region
      $region33: #{tpu_custom_call.1} parent=5 // pred_check
        _
      $region34: #{tpu_custom_call.1} parent=5 // pred_check_branch
        %250 = sbr.rel (%p247) target = $region36
      $region35: #{tpu_custom_call.1} parent=5 // pred_region
        %s251 = ssub.s32 %s17, 1
        %s252 = sand.u32 %s48, 1
        %s253 = scalar_lea.sflag [#allocation9], %s252
        %s254 = sand.u32 %s48, 1
        %s255 = smul.addr %s254, 4
        %s256 = scalar_lea.vmem [#allocation8], %s255
        // Predicated region
        $region37: #{tpu_custom_call.1} parent=35 // pred_check
          %p257 = pneg %p61
        $region38: #{tpu_custom_call.1} parent=35 // pred_check_branch
          %259 = sbr.rel (%p257) target = $region40
        $region39: #{tpu_custom_call.1} parent=35 // pred_region
          %260 = dma.done %s253, 64
        $region40: #{tpu_custom_call.1} parent=35 // pred_fallthru
          _
        %s261 = sand.u32 %s80, 1
        %s262 = scalar_lea.sflag [#allocation12], %s261
        %s263 = sand.u32 %s80, 1
        %s264 = smul.addr %s263, 4
        %s265 = scalar_lea.vmem [#allocation11], %s264
        // Predicated region
        $region41: #{tpu_custom_call.1} parent=35 // pred_check
          %p266 = pneg %p93
        $region42: #{tpu_custom_call.1} parent=35 // pred_check_branch
          %268 = sbr.rel (%p266) target = $region44
        $region43: #{tpu_custom_call.1} parent=35 // pred_region
          %269 = dma.done %s262, 64
        $region44: #{tpu_custom_call.1} parent=35 // pred_fallthru
          _
        %s270 = sand.u32 %s48, 1
        %s271 = scalar_lea.sflag [#allocation9], %s270
        %s272 = sand.u32 %s48, 1
        %s273 = smul.addr %s272, 4
        %s274 = scalar_lea.vmem [#allocation8], %s273
        %p275 = pneg %p61
        %p276 = pneg %p58
        %s277 = sand.u32 %s80, 1
        %s278 = scalar_lea.sflag [#allocation12], %s277
        %s279 = sand.u32 %s80, 1
        %s280 = smul.addr %s279, 4
        %s281 = scalar_lea.vmem [#allocation11], %s280
        %p282 = pneg %p93
        %p283 = pneg %p90
        %p284 = scmp.lt.s32.totalorder %s27, 1
        %s285 = scalar_select %p284, %s27, 1
        %s286 = smul.addr %s285, 2
        %s287 = scalar_lea.vmem %s2, %s286
        %p288 = pneg %p119
        %p289 = pneg %p116
        %p290 = scmp.lt.s32.totalorder %s27, 1
        %s291 = scalar_select %p290, %s27, 1
        %s292 = smul.addr %s291, 2
        %s293 = scalar_lea.vmem %s3, %s292
        %p294 = pneg %p145
        %p295 = pneg %p142
        %p296 = pneg %p166
        %p297 = pneg %p163
        %s298 = ssub.s32 1, %s26
        %s299 = smul.u32 %s298, %s27
        %s300 = sadd.s32 %s299, %s26
        %s301 = ssub.s32 1, %s26
        %s302 = smul.u32 %s301, %s27
        %s303 = sadd.s32 %s302, %s26
        %p304 = scmp.lt.s32.totalorder %s27, 1
        %s305 = scalar_select %p304, %s27, 1
        %s306 = smul.addr %s305, 2
        %s307 = scalar_lea.vmem %s2, %s306
        %p308 = scmp.lt.s32.totalorder %s27, 1
        %s309 = scalar_select %p308, %s27, 1
        %s310 = smul.addr %s309, 2
        %s311 = scalar_lea.vmem %s3, %s310
        %p312 = scmp.eq.s32.totalorder %s26, 0
        %p313 = scmp.eq.s32.totalorder %s27, 0
        %p314 = pnand %p312, %p313
        %p315 = pneg %p314
        // Predicated region
        $region45: #{tpu_custom_call.1} parent=35 // pred_check
          _
        $region46: #{tpu_custom_call.1} parent=35 // pred_check_branch
          %317 = sbr.rel (%p314) target = $region48
        $region47: #{tpu_custom_call.1} parent=35 // pred_region
          %vm318 = vcmask 0
          %319 = vst.msk [vmem:[#allocation13] sm:$0x1] %vm318, 0.0
          %320 = vst [vmem:[#allocation7] sm:$0x1] 0.0
          %vm321 = vcmask 1024
          %322 = vst.msk [vmem:[#allocation5] sm:$0x3] %vm321, 0.0
          %323 = vst.msk [vmem:[#allocation6] sm:$0x3] %vm321, 0.0
        $region48: #{tpu_custom_call.1} parent=35 // pred_fallthru
          _
        // Predicated region
        $region49: #{tpu_custom_call.1} parent=35 // pred_check
          %p324 = pneg %p312
        $region50: #{tpu_custom_call.1} parent=35 // pred_check_branch
          %326 = sbr.rel (%p324) target = $region52
        $region51: #{tpu_custom_call.1} parent=35 // pred_region
          %v327 = vld [vmem:[%s256] sm:$0x3]
          %v328 = vld [vmem:[%s256 + $0x2] sm:$0x3]
          %v329 = vunpack.c.l.bf16 %v327
          %v330 = vunpack.c.l.bf16 %v328
          %v331 = vld [vmem:[%s265] sm:$0x3]
          %v332 = vld [vmem:[%s265 + $0x2] sm:$0x3]
          %v333 = vunpack.c.l.bf16 %v331
          %v334 = vunpack.c.l.bf16 %v332
          %v335 = vld [vmem:[%s307] sm:$0x3]
          %v336 = vld [vmem:[%s311] sm:$0x3]
          %v337 = vld [vmem:[#allocation5] sm:$0x3]
          %vm338 = vcmp.ne.f32.partialorder %v335, 0.0
          %v339 = vsel %vm338, 1, 0
          %v340 = vcvt.s32.f32 %v339
          %vm341 = vcmask 1041408
          %v342 = vsel %vm341, %v340, 0.0
          %343 = vadd.xlane.f32.xlu0 %v342
          %v344 = vpop.xlane.xlu0 %343
          %v345 = vadd.f32 %v337, %v344
          %vm346 = vcmask 1024
          %347 = vst.msk [vmem:[#allocation5] sm:$0x3] %vm346, %v345
          %v348 = vld [vmem:[#allocation6] sm:$0x3]
          %vm349 = vcmp.ne.f32.partialorder %v336, 0.0
          %v350 = vsel %vm349, 1, 0
          %v351 = vcvt.s32.f32 %v350
          %v352 = vsel %vm341, %v351, 0.0
          %353 = vadd.xlane.f32.xlu0 %v352
          %v354 = vpop.xlane.xlu0 %353
          %v355 = vadd.f32 %v348, %v354
          %356 = vst.msk [vmem:[#allocation6] sm:$0x3] %vm346, %v355
          %v357 = vand.u32 2147483647, %v329
          %v358 = vand.u32 2147483647, %v330
          %vm359 = vcmask 1043456
          %v360 = vsel %vm359, %v357, 0.0
          %v361 = vrot.slane %v360, 4
          %v362 = vadd.f32 %v360, %v361
          %v363 = vrot.slane %v362, 2
          %v364 = vadd.f32 %v362, %v363
          %v365 = vrot.slane %v364, 1
          %v366 = vadd.f32 %v364, %v365
          %v367 = vsel %vm359, %v358, 0.0
          %v368 = vrot.slane %v367, 4
          %v369 = vadd.f32 %v367, %v368
          %v370 = vrot.slane %v369, 2
          %v371 = vadd.f32 %v369, %v370
          %v372 = vrot.slane %v371, 1
          %v373 = vadd.f32 %v371, %v372
          %v374 = vrcp.pop 4.0
          %v375 = vmul.f32 %v366, %v374
          %v376 = vmul.f32 %v373, %v374
          %v377 = vand.u32 2147483647, %v333
          %v378 = vand.u32 2147483647, %v334
          %v379 = vsel %vm359, %v377, 0.0
          %v380 = vrot.slane %v379, 4
          %v381 = vadd.f32 %v379, %v380
          %v382 = vrot.slane %v381, 2
          %v383 = vadd.f32 %v381, %v382
          %v384 = vrot.slane %v383, 1
          %v385 = vadd.f32 %v383, %v384
          %v386 = vsel %vm359, %v378, 0.0
          %v387 = vrot.slane %v386, 4
          %v388 = vadd.f32 %v386, %v387
          %v389 = vrot.slane %v388, 2
          %v390 = vadd.f32 %v388, %v389
          %v391 = vrot.slane %v390, 1
          %v392 = vadd.f32 %v390, %v391
          %v393 = vmul.f32 %v385, %v374
          %v394 = vmul.f32 %v392, %v374
          %vm397 = vcmask 1041409
          %v398 = vsel %vm397, %v376, %v375
          %s400 = smul.u32 %s27, 2
          %s401 = scalar_lea.vmem [#allocation2], %s400
          %402 = vst [vmem:[%s401] sm:$0x3] %v398
          %v405 = vsel %vm397, %v394, %v393
          %s407 = scalar_lea.vmem [#allocation3], %s400
          %408 = vst [vmem:[%s407] sm:$0x3] %v405
          %v409 = vmul.f32 %v377, 2.0
          %v410 = vmul.f32 %v378, 2.0
          %v411 = vsel %vm359, %v409, -inf
          %v412 = vrot.slane %v411, 4
          %v413 = vmax.f32 %v411, %v412
          %v414 = vrot.slane %v413, 2
          %v415 = vmax.f32 %v413, %v414
          %v416 = vrot.slane %v415, 1
          %v417 = vmax.f32 %v415, %v416
          %v418 = vsel %vm359, %v410, -inf
          %v419 = vrot.slane %v418, 4
          %v420 = vmax.f32 %v418, %v419
          %v421 = vrot.slane %v420, 2
          %v422 = vmax.f32 %v420, %v421
          %v423 = vrot.slane %v422, 1
          %v424 = vmax.f32 %v422, %v423
          %v425 = vsub.f32 %v409, %v417
          %v426 = vsub.f32 %v410, %v424
          %v427 = vmul.f32 %v425, 1.442695
          %v428 = vpow.pop %v427
          %v429 = vmul.f32 %v426, 1.442695
          %v430 = vpow.pop %v429
          %v431 = vsel %vm359, %v428, 0.0
          %v432 = vrot.slane %v431, 4
          %v433 = vadd.f32 %v431, %v432
          %v434 = vrot.slane %v433, 2
          %v435 = vadd.f32 %v433, %v434
          %v436 = vrot.slane %v435, 1
          %v437 = vadd.f32 %v435, %v436
          %v438 = vsel %vm359, %v430, 0.0
          %v439 = vrot.slane %v438, 4
          %v440 = vadd.f32 %v438, %v439
          %v441 = vrot.slane %v440, 2
          %v442 = vadd.f32 %v440, %v441
          %v443 = vrot.slane %v442, 1
          %v444 = vadd.f32 %v442, %v443
          %v445 = vrcp.pop %v437
          %v446 = vmul.f32 4.0, %v445
          %v447 = vrcp.pop %v444
          %v448 = vmul.f32 4.0, %v447
          %v449 = vmul.f32 %v428, %v446
          %v450 = vmul.f32 %v430, %v448
          %v451 = vmul.f32 %v357, 2.0
          %v452 = vmul.f32 %v358, 2.0
          %v453 = vsel %vm359, %v451, -inf
          %v454 = vrot.slane %v453, 4
          %v455 = vmax.f32 %v453, %v454
          %v456 = vrot.slane %v455, 2
          %v457 = vmax.f32 %v455, %v456
          %v458 = vrot.slane %v457, 1
          %v459 = vmax.f32 %v457, %v458
          %v460 = vsel %vm359, %v452, -inf
          %v461 = vrot.slane %v460, 4
          %v462 = vmax.f32 %v460, %v461
          %v463 = vrot.slane %v462, 2
          %v464 = vmax.f32 %v462, %v463
          %v465 = vrot.slane %v464, 1
          %v466 = vmax.f32 %v464, %v465
          %v467 = vsub.f32 %v451, %v459
          %v468 = vsub.f32 %v452, %v466
          %v469 = vmul.f32 %v467, 1.442695
          %v470 = vpow.pop %v469
          %v471 = vmul.f32 %v468, 1.442695
          %v472 = vpow.pop %v471
          %v473 = vsel %vm359, %v470, 0.0
          %v474 = vrot.slane %v473, 4
          %v475 = vadd.f32 %v473, %v474
          %v476 = vrot.slane %v475, 2
          %v477 = vadd.f32 %v475, %v476
          %v478 = vrot.slane %v477, 1
          %v479 = vadd.f32 %v477, %v478
          %v480 = vsel %vm359, %v472, 0.0
          %v481 = vrot.slane %v480, 4
          %v482 = vadd.f32 %v480, %v481
          %v483 = vrot.slane %v482, 2
          %v484 = vadd.f32 %v482, %v483
          %v485 = vrot.slane %v484, 1
          %v486 = vadd.f32 %v484, %v485
          %v487 = vrcp.pop %v479
          %v488 = vmul.f32 4.0, %v487
          %v489 = vrcp.pop %v486
          %v490 = vmul.f32 4.0, %v489
          %v491 = vmul.f32 %v470, %v488
          %v492 = vmul.f32 %v472, %v490
          %v493 = vsub.f32 %v329, %v333
          %v494 = vsub.f32 %v330, %v334
          %v495 = vmul.f32 %v493, %v493
          %v496 = vmul.f32 %v494, %v494
          %v497 = vmul.f32 %v495, %v449
          %v498 = vmul.f32 %v496, %v450
          %v499 = vsel %vm359, %v497, 0.0
          %v500 = vrot.slane %v499, 4
          %v501 = vadd.f32 %v499, %v500
          %v502 = vrot.slane %v501, 2
          %v503 = vadd.f32 %v501, %v502
          %v504 = vrot.slane %v503, 1
          %v505 = vadd.f32 %v503, %v504
          %v506 = vsel %vm359, %v498, 0.0
          %v507 = vrot.slane %v506, 4
          %v508 = vadd.f32 %v506, %v507
          %v509 = vrot.slane %v508, 2
          %v510 = vadd.f32 %v508, %v509
          %v511 = vrot.slane %v510, 1
          %v512 = vadd.f32 %v510, %v511
          %v515 = vsel %vm397, %v512, %v505
          %s517 = scalar_lea.vmem [#allocation4], %s400
          %518 = vst [vmem:[%s517] sm:$0x3] %v515
          %v519 = vsub.f32 %v491, %v449
          %v520 = vsub.f32 %v492, %v450
          %v521 = vand.u32 2147483647, %v519
          %v522 = vand.u32 2147483647, %v520
          %v523 = vsel %vm359, %v521, 0.0
          %v524 = vsel %vm359, %v522, 0.0
          %v525 = vadd.f32 %v523, %v524
          %v526 = vrot.slane %v525, 4
          %v527 = vadd.f32 %v525, %v526
          %v528 = vrot.slane %v527, 2
          %v529 = vadd.f32 %v527, %v528
          %v530 = vrot.slane %v529, 1
          %v531 = vadd.f32 %v529, %v530
          %v532 = vld [vmem:[#allocation7] sm:$0x1]
          %v533 = vmul.f32 %v531, 9.765625e-10
          %v534 = vadd.f32 %v532, %v533
          %535 = vst [vmem:[#allocation7] sm:$0x1] %v534
        $region52: #{tpu_custom_call.1} parent=35 // pred_fallthru
          _
        %p536 = scmp.eq.s32.totalorder %s26, 1
        // Predicated region
        $region53: #{tpu_custom_call.1} parent=35 // pred_check
          %p537 = pneg %p536
        $region54: #{tpu_custom_call.1} parent=35 // pred_check_branch
          %539 = sbr.rel (%p537) target = $region56
        $region55: #{tpu_custom_call.1} parent=35 // pred_region
          // Predicated region
          $region57: #{tpu_custom_call.1} parent=55 // pred_check
            %p540 = pneg %p313
          $region58: #{tpu_custom_call.1} parent=55 // pred_check_branch
            %542 = sbr.rel (%p540) target = $region60
          $region59: #{tpu_custom_call.1} parent=55 // pred_region
            loop: start=0, step=1, limit=2
            $region61: #{tpu_custom_call.1} parent=59 // loop_pre_header
              _
            $region62: #{tpu_custom_call.1} parent=59 // loop_header
              %s544 = sphi 0, %s548
              %p545 = scmp.ge.s32.totalorder %s544, 2
              %v549 = vphi -1e+30, %v564
              %v550 = vphi 0.0, %v579
              %v551 = vphi -1e+30, %v568
              %v552 = vphi 0.0, %v590
            $region63: #{tpu_custom_call.1} parent=59 // loop_header_branch
              %547 = sbr.rel (%p545) target = $region67
            $region64: #{tpu_custom_call.1} parent=59 // loop_body
              %s553 = smul.u32 %s544, 2
              %s554 = scalar_lea.vmem [#allocation2], %s553
              %v555 = vld [vmem:[%s554] sm:$0x3]
              %v556 = vmul.f32 %v555, 2.0
              %s557 = scalar_lea.vmem [#allocation3], %s553
              %v558 = vld [vmem:[%s557] sm:$0x3]
              %v559 = vmul.f32 %v558, 2.0
              %vm560 = vcmask 1041408
              %v561 = vsel %vm560, %v556, -inf
              %562 = vmax.xlane.f32.xlu0 %v561
              %v563 = vpop.xlane.xlu0 %562
              %v564 = vmax.f32 %v549, %v563
              %v565 = vsel %vm560, %v559, -inf
              %566 = vmax.xlane.f32.xlu0 %v565
              %v567 = vpop.xlane.xlu0 %566
              %v568 = vmax.f32 %v551, %v567
              %v569 = vsub.f32 %v549, %v564
              %v570 = vmul.f32 %v569, 1.442695
              %v571 = vpow.pop %v570
              %v572 = vmul.f32 %v550, %v571
              %v573 = vsub.f32 %v556, %v564
              %v574 = vmul.f32 %v573, 1.442695
              %v575 = vpow.pop %v574
              %v576 = vsel %vm560, %v575, 0.0
              %577 = vadd.xlane.f32.xlu0 %v576
              %v578 = vpop.xlane.xlu0 %577
              %v579 = vadd.f32 %v572, %v578
              %v580 = vsub.f32 %v551, %v568
              %v581 = vmul.f32 %v580, 1.442695
              %v582 = vpow.pop %v581
              %v583 = vmul.f32 %v552, %v582
              %v584 = vsub.f32 %v559, %v568
              %v585 = vmul.f32 %v584, 1.442695
              %v586 = vpow.pop %v585
              %v587 = vsel %vm560, %v586, 0.0
              %588 = vadd.xlane.f32.xlu0 %v587
              %v589 = vpop.xlane.xlu0 %588
              %v590 = vadd.f32 %v583, %v589
            $region65: #{tpu_custom_call.1} parent=59 // loop_footer
              %s548 = sadd.s32 1, %s544
            $region66: #{tpu_custom_call.1} parent=59 // loop_footer_branch
              %543 = sbr.rel target = $region62
            $region67: #{tpu_custom_call.1} parent=59 // loop_exit
              _
            %v591 = vrcp.pop %v550
            %v592 = vmul.f32 256.0, %v591
            %v593 = vrcp.pop %v552
            %v594 = vmul.f32 256.0, %v593
            loop: start=0, step=1, limit=2
            $region68: #{tpu_custom_call.1} parent=59 // loop_pre_header
              _
            $region69: #{tpu_custom_call.1} parent=59 // loop_header
              %s596 = sphi 0, %s600
              %p597 = scmp.ge.s32.totalorder %s596, 2
            $region70: #{tpu_custom_call.1} parent=59 // loop_header_branch
              %599 = sbr.rel (%p597) target = $region74
            $region71: #{tpu_custom_call.1} parent=59 // loop_body
              %s601 = smul.u32 %s596, 2
              %s602 = scalar_lea.vmem [#allocation2], %s601
              %v603 = vld [vmem:[%s602] sm:$0x3]
              %v604 = vmul.f32 %v603, 2.0
              %v605 = vsub.f32 %v604, %v549
              %v606 = vmul.f32 %v605, 1.442695
              %v607 = vpow.pop %v606
              %v608 = vmul.f32 %v607, %v592
              %s609 = scalar_lea.vmem [#allocation3], %s601
              %v610 = vld [vmem:[%s609] sm:$0x3]
              %v611 = vmul.f32 %v610, 2.0
              %v612 = vsub.f32 %v611, %v551
              %v613 = vmul.f32 %v612, 1.442695
              %v614 = vpow.pop %v613
              %v615 = vmul.f32 %v614, %v594
              %616 = vst [vmem:[%s609] sm:$0x3] %v615
              %v617 = vld [vmem:[#allocation7] sm:$0x1]
              %v618 = vsub.f32 %v608, %v615
              %v619 = vand.u32 2147483647, %v618
              %vm620 = vcmask 1041408
              %v621 = vsel %vm620, %v619, 0.0
              %v622 = vrot.slane %v621, 4
              %v623 = vadd.f32 %v621, %v622
              %v624 = vrot.slane %v623, 2
              %v625 = vadd.f32 %v623, %v624
              %v626 = vrot.slane %v625, 1
              %v627 = vadd.f32 %v625, %v626
              %v628 = vmul.f32 %v627, 2.5e-07
              %v629 = vadd.f32 %v617, %v628
              %630 = vst [vmem:[#allocation7] sm:$0x1] %v629
            $region72: #{tpu_custom_call.1} parent=59 // loop_footer
              %s600 = sadd.s32 1, %s596
            $region73: #{tpu_custom_call.1} parent=59 // loop_footer_branch
              %595 = sbr.rel target = $region69
            $region74: #{tpu_custom_call.1} parent=59 // loop_exit
              _
          $region60: #{tpu_custom_call.1} parent=55 // pred_fallthru
            _
          %v631 = vld [vmem:[%s307] sm:$0x3]
          %v632 = vld [vmem:[%s311] sm:$0x3]
          %v633 = vld [vmem:[#allocation5] sm:$0x3]
          %v634 = vmax.f32 %v633, 1e-10
          %v635 = vrcp.pop %v634
          %v636 = vmul.f32 1.0, %v635
          %v637 = vld [vmem:[#allocation6] sm:$0x3]
          %v638 = vmax.f32 %v637, 1e-10
          %v639 = vrcp.pop %v638
          %v640 = vmul.f32 1.0, %v639
          %642 = vset.pattern.permute.xlu0 0
          %643 = vperm.xlu0 %642, %v636
          %v644 = vpop.permute.xlu0 %643
          %v646 = vmul.f32 %v631, %v644
          %vm647 = vcmask 1041408
          %v648 = vsel %vm647, %v646, 0.0
          %v649 = vrot.slane %v648, 4
          %v650 = vadd.f32 %v648, %v649
          %v651 = vrot.slane %v650, 2
          %v652 = vadd.f32 %v650, %v651
          %v653 = vrot.slane %v652, 1
          %v654 = vadd.f32 %v652, %v653
          %656 = vset.pattern.permute.xlu0 0
          %657 = vperm.xlu0 %656, %v640
          %v658 = vpop.permute.xlu0 %657
          %v660 = vmul.f32 %v632, %v658
          %v661 = vsel %vm647, %v660, 0.0
          %v662 = vrot.slane %v661, 4
          %v663 = vadd.f32 %v661, %v662
          %v664 = vrot.slane %v663, 2
          %v665 = vadd.f32 %v663, %v664
          %v666 = vrot.slane %v665, 1
          %v667 = vadd.f32 %v665, %v666
          %s668 = smul.u32 %s27, 2
          %s669 = scalar_lea.vmem [#allocation3], %s668
          %v670 = vld [vmem:[%s669] sm:$0x3]
          %s671 = scalar_lea.vmem [#allocation4], %s668
          %v672 = vld [vmem:[%s671] sm:$0x3]
          %v673 = vmul.f32 %v670, %v672
          %v674 = vsel %vm647, %v673, 0.0
          %v675 = vrot.slane %v674, 4
          %v676 = vadd.f32 %v674, %v675
          %v677 = vrot.slane %v676, 2
          %v678 = vadd.f32 %v676, %v677
          %v679 = vrot.slane %v678, 1
          %v680 = vadd.f32 %v678, %v679
          %v681 = vld [vmem:[#allocation7] sm:$0x1]
          %v682 = vmul.f32 %v654, 0.0005
          %v683 = vmul.f32 %v667, 0.00025
          %v684 = vadd.f32 %v682, %v683
          %v685 = vmul.f32 %v684, %v680
          %v686 = vadd.f32 %v681, %v685
          %687 = vst [vmem:[#allocation7] sm:$0x1] %v686
        $region56: #{tpu_custom_call.1} parent=35 // pred_fallthru
          _
        %p688 = scmp.eq.s32.totalorder %s27, 1
        %p689 = pnand %p536, %p688
        %p690 = pneg %p689
        // Predicated region
        $region75: #{tpu_custom_call.1} parent=35 // pred_check
          _
        $region76: #{tpu_custom_call.1} parent=35 // pred_check_branch
          %692 = sbr.rel (%p689) target = $region78
        $region77: #{tpu_custom_call.1} parent=35 // pred_region
          %v693 = vld [vmem:[#allocation7] sm:$0x1]
          %vm694 = vcmask 1040384
          %v695 = vsel %vm694, %v693, 0.0
          %696 = vadd.xlane.f32.xlu0 %v695
          %v697 = vpop.xlane.xlu0 %696
          %v698 = vrot.slane %v697, 4
          %v699 = vadd.f32 %v697, %v698
          %v700 = vrot.slane %v699, 2
          %v701 = vadd.f32 %v699, %v700
          %v702 = vrot.slane %v701, 1
          %v703 = vadd.f32 %v701, %v702
          %s704 = vtos %v703
          %v705 = vstv %s704
          %vm706 = vcmask 0
          %707 = vst.msk [vmem:[#allocation13] sm:$0x1] %vm706, %v705
        $region78: #{tpu_custom_call.1} parent=35 // pred_fallthru
          _
        // Predicated region
        $region79: #{tpu_custom_call.1} parent=35 // pred_check
          %p708 = pneg %p163
        $region80: #{tpu_custom_call.1} parent=35 // pred_check_branch
          %710 = sbr.rel (%p708) target = $region82
        $region81: #{tpu_custom_call.1} parent=35 // pred_region
          %s712 = ssub.s32 16, 16
          %713 = vsyncadd [#allocation10], %s712
          %s715 = sshll.u32 [#allocation13], 4
          %s716 = int_to_ptr.vmem [resolvable:$true] %s715
          %718 = dma.vmem_to_hbm [thread:$0]  %s716, 16, %s4, [#allocation10]
        $region82: #{tpu_custom_call.1} parent=35 // pred_fallthru
          _
        // Predicated region
        $region83: #{tpu_custom_call.1} parent=35 // pred_check
          %p719 = pneg %p163
        $region84: #{tpu_custom_call.1} parent=35 // pred_check_branch
          %721 = sbr.rel (%p719) target = $region86
        $region85: #{tpu_custom_call.1} parent=35 // pred_region
          %722 = dma.done [#allocation10], 16
        $region86: #{tpu_custom_call.1} parent=35 // pred_fallthru
          _
      $region36: #{tpu_custom_call.1} parent=5 // pred_fallthru
        _
      %p723 = scmp.le.s32.totalorder 2, %s17
      // Predicated region
      $region87: #{tpu_custom_call.1} parent=5 // pred_check
        %p724 = pneg %p723
      $region88: #{tpu_custom_call.1} parent=5 // pred_check_branch
        %726 = sbr.rel (%p724) target = $region90
      $region89: #{tpu_custom_call.1} parent=5 // pred_region
        %s727 = ssub.s32 %s17, 2
      $region90: #{tpu_custom_call.1} parent=5 // pred_fallthru
        _
    $region6: #{tpu_custom_call.1} parent=1 // loop_footer
      %s21 = sadd.s32 1, %s17
    $region7: #{tpu_custom_call.1} parent=1 // loop_footer_branch
      %16 = sbr.rel target = $region3
    $region8: #{tpu_custom_call.1} parent=1 // loop_exit
      _
    %728 = vsyncpa [#allocation9], 1
    %s729 = scalar_lea.sflag [#allocation9], 1
    %730 = vsyncpa %s729, 1
    %731 = vsyncpa [#allocation12], 1
    %s732 = scalar_lea.sflag [#allocation12], 1
    %733 = vsyncpa %s732, 1
    %734 = vsyncpa [#allocation10], 1
    %s735 = scalar_lea.sflag [#allocation10], 1
    %736 = vsyncpa %s735, 1

</llo_original>
